<compile_context>
chip_gen: v5e
topology: v5e:2x2
jax: 0.10.0
libtpu: 0.0.40
codegen_flags: <defaults>
</compile_context>

<pallas_src>
import functools

import jax
import jax.numpy as jnp
import numpy as np
from jax.experimental import pallas as pl
from jax.experimental.pallas import tpu as pltpu


# ----------------------------------------------------------------------------
# Pallas kernel: full GINEBaseModel forward on one graph batch (grid=()).
# All gather / scatter / pooling are small incidence-matrix MXU matmuls.
# ----------------------------------------------------------------------------
def gine_base_kernel(
    # scalar (SMEM)
    eps_ref,        # [L]  f32           GINE eps per layer
    # dense (VMEM) operands — feature axes zero-padded to H_pad lanes
    xin_ref,        # [N_pad, K_pad]     [X_n | PE]
    w_in_ref,       # [K_pad, H_pad]     [W_node ; W_pe]
    b_in_ref,       # [1, H_pad]         b_node + b_pe
    e_emb_ref,      # [E_pad, H_pad]     edge embeddings (zeros on padded rows)
    s_src_ref,      # [E_pad, N_pad]     one-hot src incidence (gather)
    d_dst_t_ref,    # [N_pad, E_pad]     one-hot dst incidence, transposed
    w1_ref, b1_ref, w2_ref, b2_ref,      # [L,H,H], [L,1,H], [L,H,H], [L,1,H]
    wf1_ref, bf1_ref, wf2_ref, bf2_ref,  # output MLP (wf2/bf2 lane-padded)
    pool_ref,       # [B_pad, N_pad]     mean-pool matrix (1/count folded in)
    # output
    out_ref,        # [B_pad, T_pad]
):
    f32 = jnp.float32

    # ---- fused node + PE encoder ------------------------------------------
    h = (jnp.dot(xin_ref[...], w_in_ref[...], preferred_element_type=f32)
         + b_in_ref[...])

    n_layers = w1_ref.shape[0]
    # Static unroll: n_layers is small & static.
    for l in range(n_layers):
        # -- gather + message: msg = ReLU(h[src] + e) -------------------------
        msg = jnp.maximum(
            jnp.dot(s_src_ref[...], h, preferred_element_type=f32)
            + e_emb_ref[...], 0.0)
        # -- scatter-add folded with (1+eps)*h ---------------------------------
        agg = ((1.0 + eps_ref[l]) * h
               + jnp.dot(d_dst_t_ref[...], msg, preferred_element_type=f32))
        # -- GINE node update: MLP_l(agg) --------------------------------------
        hid = jnp.maximum(
            jnp.dot(agg, w1_ref[l], preferred_element_type=f32) + b1_ref[l],
            0.0)
        h = jnp.dot(hid, w2_ref[l], preferred_element_type=f32) + b2_ref[l]

    # ---- global mean pooling (one matmul) -----------------------------------
    pooled = jnp.dot(pool_ref[...], h, preferred_element_type=f32)

    # ---- output MLP ----------------------------------------------------------
    hid = jnp.maximum(
        jnp.dot(pooled, wf1_ref[...], preferred_element_type=f32)
        + bf1_ref[...], 0.0)
    out_ref[...] = (
        jnp.dot(hid, wf2_ref[...], preferred_element_type=f32) + bf2_ref[...])


# ----------------------------------------------------------------------------
# Wrapper: fuses encoders, builds incidence/pool matrices, pads, calls kernel.
# ----------------------------------------------------------------------------
def _round_up(v, m):
    return ((v + m - 1) // m) * m


def _pad_to(x, target, axis):
    pad = target - x.shape[axis]
    if pad <= 0:
        return x
    widths = [(0, 0)] * x.ndim
    widths[axis] = (0, pad)
    return jnp.pad(x, widths)


@functools.partial(jax.jit, static_argnames=("num_graphs",))
def gine_base_forward(params, X_n, edge_index, edge_attr, PE, batch, num_graphs):
    N, in_dims = X_n.shape
    E = edge_index.shape[1]
    pe_emb = PE.shape[1]
    hidden = params["w_node"].shape[1]
    target_dim = params["wf2"].shape[1]

    # Padded sizes: feature (lane) axes -> multiples of 128, rows -> x8.
    H_pad = _round_up(hidden, 128)
    K_pad = _round_up(in_dims + pe_emb, 128)
    T_pad = _round_up(target_dim, 128)       # lane-dense output stores
    N_pad = _round_up(N, 8)
    E_pad = _round_up(E, 8)
    B_pad = _round_up(num_graphs, 8)

    # Fused node + PE encoder operands.
    x_in = _pad_to(_pad_to(jnp.concatenate([X_n, PE], axis=1), K_pad, 1),
                   N_pad, 0)
    w_in = _pad_to(_pad_to(
        jnp.concatenate([params["w_node"], params["w_pe"]], axis=0),
        K_pad, 0), H_pad, 1)
    b_in = _pad_to(params["b_node"] + params["b_pe"], H_pad, 1)

    # Edge-type embeddings gathered in the wrapper (layer-invariant, cheap).
    e_emb = _pad_to(_pad_to(params["edge_tab"][edge_attr.astype(jnp.int32)],
                            H_pad, 1), E_pad, 0)

    # Incidence matrices (padded rows / columns are all-zero => no masking
    # needed in the kernel; padded node rows of h never contribute).
    src = edge_index[0].astype(jnp.int32)
    dst = edge_index[1].astype(jnp.int32)
    s_src = _pad_to(_pad_to(jax.nn.one_hot(src, N, dtype=jnp.float32),
                            N_pad, 1), E_pad, 0)           # [E_pad, N_pad]
    d_dst_t = _pad_to(_pad_to(jax.nn.one_hot(dst, N, dtype=jnp.float32).T,
                              E_pad, 1), N_pad, 0)          # [N_pad, E_pad]

    # Mean-pool matrix with 1/count folded in.  P[g, i] = (batch[i]==g)/cnt[g].
    nbatch = batch.astype(jnp.int32)
    counts = jax.ops.segment_sum(jnp.ones((N,), jnp.float32), nbatch,
                                 num_segments=num_graphs)
    inv_cnt = 1.0 / jnp.maximum(counts, 1.0)
    pool_mat = (jax.nn.one_hot(nbatch, num_graphs, dtype=jnp.float32).T
                * inv_cnt[:, None])
    pool_mat = _pad_to(_pad_to(pool_mat, N_pad, 1), B_pad, 0)  # [B_pad, N_pad]

    # Layer + output MLP weights (zero-padded; zeros keep semantics exact).
    w1 = _pad_to(_pad_to(params["w1"], H_pad, 1), H_pad, 2)
    b1 = _pad_to(params["b1"], H_pad, 2)
    w2 = _pad_to(_pad_to(params["w2"], H_pad, 1), H_pad, 2)
    b2 = _pad_to(params["b2"], H_pad, 2)
    wf1 = _pad_to(_pad_to(params["wf1"], H_pad, 0), H_pad, 1)
    bf1 = _pad_to(params["bf1"], H_pad, 1)
    wf2 = _pad_to(_pad_to(params["wf2"], H_pad, 0), T_pad, 1)
    bf2 = _pad_to(params["bf2"], T_pad, 1)

    eps = params["eps"].astype(jnp.float32)

    smem = pl.BlockSpec(memory_space=pltpu.MemorySpace.SMEM)
    vmem = pl.BlockSpec(memory_space=pltpu.MemorySpace.VMEM)

    operands = (eps,
                x_in, w_in, b_in, e_emb, s_src, d_dst_t,
                w1, b1, w2, b2, wf1, bf1, wf2, bf2, pool_mat)
    in_specs = [smem] + [vmem] * (len(operands) - 1)

    # Scoped-VMEM limit from the real footprint (+ headroom), capped at 64 MiB
    # so it is safe on v7x as well as v5e/v6e.
    dense_bytes = sum(int(np.prod(o.shape)) * 4 for o in operands[1:])
    live_bytes = (2 * N_pad + E_pad + B_pad) * H_pad * 4   # h/agg/msg/pooled
    vmem_limit = int(min(64 << 20,
                         max(16 << 20, 2 * (dense_bytes + live_bytes))))

    out = pl.pallas_call(
        gine_base_kernel,
        out_shape=jax.ShapeDtypeStruct((B_pad, T_pad), jnp.float32),
        in_specs=in_specs,
        out_specs=vmem,
        compiler_params=pltpu.CompilerParams(vmem_limit_bytes=vmem_limit),
    )(*operands)

    y = out[:num_graphs, :target_dim]
    if target_dim == 1:            # matches Y_pred.squeeze(dim=1)
        y = jnp.squeeze(y, axis=1)
    return y


# ----------------------------------------------------------------------------
# Pure-JAX reference (for correctness check).
# ----------------------------------------------------------------------------
def gine_base_reference(params, X_n, edge_index, edge_attr, PE, batch, num_graphs):
    h = X_n @ params["w_node"] + params["b_node"]
    h = h + PE @ params["w_pe"] + params["b_pe"]
    e = params["edge_tab"][edge_attr]
    src, dst = edge_index[0], edge_index[1]
    n_layers = params["w1"].shape[0]
    for l in range(n_layers):
        msg = jnp.maximum(h[src] + e, 0.0)
        agg = jax.ops.segment_sum(msg, dst, num_segments=h.shape[0])
        z = (1.0 + params["eps"][l]) * h + agg
        hid = jnp.maximum(z @ params["w1"][l] + params["b1"][l], 0.0)
        h = hid @ params["w2"][l] + params["b2"][l]
    pooled = jax.ops.segment_sum(h, batch, num_segments=num_graphs)
    counts = jax.ops.segment_sum(jnp.ones((h.shape[0], 1)), batch,
                                 num_segments=num_graphs)
    pooled = pooled / jnp.maximum(counts, 1.0)
    hid = jnp.maximum(pooled @ params["wf1"] + params["bf1"], 0.0)
    y = hid @ params["wf2"] + params["bf2"]
    return jnp.squeeze(y, axis=1)


# ----------------------------------------------------------------------------
# Deterministic parameter init.
# ----------------------------------------------------------------------------
def init_params(key, n_layers, n_edge_types, in_dims, hidden, pe_emb, target_dim):
    def dense(k, fan_in, shape):
        return jax.random.normal(k, shape, jnp.float32) / np.sqrt(fan_in)

    ks = jax.random.split(key, 16)
    return {
        "w_node": dense(ks[0], in_dims, (in_dims, hidden)),
        "b_node": jnp.zeros((1, hidden), jnp.float32),
        "w_pe": dense(ks[1], pe_emb, (pe_emb, hidden)),
        "b_pe": jnp.zeros((1, hidden), jnp.float32),
        "edge_tab": dense(ks[2], 1, (n_edge_types, hidden)) * 0.1,
        "eps": jnp.zeros((n_layers,), jnp.float32),
        "w1": dense(ks[3], hidden, (n_layers, hidden, hidden)),
        "b1": jnp.zeros((n_layers, 1, hidden), jnp.float32),
        "w2": dense(ks[4], hidden, (n_layers, hidden, hidden)),
        "b2": jnp.zeros((n_layers, 1, hidden), jnp.float32),
        "wf1": dense(ks[5], hidden, (hidden, hidden)),
        "bf1": jnp.zeros((1, hidden), jnp.float32),
        "wf2": dense(ks[6], hidden, (hidden, target_dim)),
        "bf2": jnp.zeros((1, target_dim), jnp.float32),
    }


if __name__ == "__main__":
    # Small shapes consistent with the module's forward.
    N, E = 32, 64              # nodes, edges
    in_dims, hidden = 8, 32
    pe_emb = 37                # module default
    n_layers, n_edge_types = 2, 4
    target_dim = 1
    num_graphs = 2

    key = jax.random.PRNGKey(0)
    kx, kpe, ksrc, kdst, kea, kp = jax.random.split(key, 6)

    X_n = jax.random.normal(kx, (N, in_dims), jnp.float32)
    PE = jax.random.normal(kpe, (N, pe_emb), jnp.float32)
    edge_index = jnp.stack([
        jax.random.randint(ksrc, (E,), 0, N, jnp.int32),
        jax.random.randint(kdst, (E,), 0, N, jnp.int32),
    ])
    edge_attr = jax.random.randint(kea, (E,), 0, n_edge_types, jnp.int32)
    batch = jnp.concatenate([jnp.zeros((N // 2,), jnp.int32),
                             jnp.ones((N - N // 2,), jnp.int32)])
    snorm = jnp.ones((N, 1), jnp.float32)  # accepted but unused by this forward

    params = init_params(kp, n_layers, n_edge_types, in_dims, hidden,
                         pe_emb, target_dim)

    y = gine_base_forward(params, X_n, edge_index, edge_attr, PE, batch,
                          num_graphs)
    y = jax.block_until_ready(y)

    y_ref = gine_base_reference(params, X_n, edge_index, edge_attr, PE, batch,
                                num_graphs)
    np.testing.assert_allclose(np.asarray(y), np.asarray(y_ref),
                               rtol=5e-3, atol=5e-3)
    assert y.shape == (num_graphs,)
    print("KERNEL_OK")
</pallas_src>

<mosaic_0001>
module attributes {stable_mosaic.version = 11 : i64} {
  func.func @gine_base_kernel(%arg0: memref<2xf32, #tpu.memory_space<smem>>, %arg1: memref<32x128xf32, #tpu.memory_space<vmem>>, %arg2: memref<128x128xf32, #tpu.memory_space<vmem>>, %arg3: memref<1x128xf32, #tpu.memory_space<vmem>>, %arg4: memref<64x128xf32, #tpu.memory_space<vmem>>, %arg5: memref<64x32xf32, #tpu.memory_space<vmem>>, %arg6: memref<32x64xf32, #tpu.memory_space<vmem>>, %arg7: memref<2x128x128xf32, #tpu.memory_space<vmem>>, %arg8: memref<2x1x128xf32, #tpu.memory_space<vmem>>, %arg9: memref<2x128x128xf32, #tpu.memory_space<vmem>>, %arg10: memref<2x1x128xf32, #tpu.memory_space<vmem>>, %arg11: memref<128x128xf32, #tpu.memory_space<vmem>>, %arg12: memref<1x128xf32, #tpu.memory_space<vmem>>, %arg13: memref<128x128xf32, #tpu.memory_space<vmem>>, %arg14: memref<1x128xf32, #tpu.memory_space<vmem>>, %arg15: memref<8x32xf32, #tpu.memory_space<vmem>>, %arg16: memref<8x128xf32, #tpu.memory_space<vmem>>) attributes {dimension_semantics = [], scalar_prefetch = 0 : i64, scratch_operands = 0 : i64, tpu.core_type = #tpu.core_type<tc>} {
    %c0 = arith.constant 0 : index
    %c0_0 = arith.constant 0 : index
    %0 = vector.load %arg1[%c0, %c0_0] : memref<32x128xf32, #tpu.memory_space<vmem>>, vector<32x128xf32>
    %c0_1 = arith.constant 0 : index
    %c0_2 = arith.constant 0 : index
    %1 = vector.load %arg2[%c0_1, %c0_2] : memref<128x128xf32, #tpu.memory_space<vmem>>, vector<128x128xf32>
    %cst = arith.constant dense<0.000000e+00> : vector<32x128xf32>
    %2 = tpu.matmul %0, %1, %cst {dimension_numbers = #tpu.dot_dimension_numbers<[1], [0], [0], [1], [0, 0, 1, 1], [], []>} : vector<32x128xf32>, vector<128x128xf32>, vector<32x128xf32> -> vector<32x128xf32>
    %c0_3 = arith.constant 0 : index
    %c0_4 = arith.constant 0 : index
    %3 = vector.load %arg3[%c0_3, %c0_4] : memref<1x128xf32, #tpu.memory_space<vmem>>, vector<1x128xf32>
    %4 = vector.broadcast %3 : vector<1x128xf32> to vector<32x128xf32>
    %5 = arith.addf %2, %4 : vector<32x128xf32>
    %c0_5 = arith.constant 0 : index
    %c0_6 = arith.constant 0 : index
    %6 = vector.load %arg5[%c0_5, %c0_6] : memref<64x32xf32, #tpu.memory_space<vmem>>, vector<64x32xf32>
    %cst_7 = arith.constant dense<0.000000e+00> : vector<64x128xf32>
    %7 = tpu.matmul %6, %5, %cst_7 {dimension_numbers = #tpu.dot_dimension_numbers<[1], [0], [0], [1], [0, 0, 1, 1], [], []>} : vector<64x32xf32>, vector<32x128xf32>, vector<64x128xf32> -> vector<64x128xf32>
    %c0_8 = arith.constant 0 : index
    %c0_9 = arith.constant 0 : index
    %8 = vector.load %arg4[%c0_8, %c0_9] : memref<64x128xf32, #tpu.memory_space<vmem>>, vector<64x128xf32>
    %9 = arith.addf %7, %8 : vector<64x128xf32>
    %cst_10 = arith.constant 0.000000e+00 : f32
    %10 = vector.broadcast %cst_10 : f32 to vector<64x128xf32>
    %11 = arith.maximumf %9, %10 : vector<64x128xf32>
    %c0_11 = arith.constant 0 : index
    %12 = memref.load %arg0[%c0_11] : memref<2xf32, #tpu.memory_space<smem>>
    %cst_12 = arith.constant 1.000000e+00 : f32
    %13 = arith.addf %cst_12, %12 : f32
    %14 = vector.broadcast %13 : f32 to vector<32x128xf32>
    %15 = arith.mulf %14, %5 : vector<32x128xf32>
    %c0_13 = arith.constant 0 : index
    %c0_14 = arith.constant 0 : index
    %16 = vector.load %arg6[%c0_13, %c0_14] : memref<32x64xf32, #tpu.memory_space<vmem>>, vector<32x64xf32>
    %cst_15 = arith.constant dense<0.000000e+00> : vector<32x128xf32>
    %17 = tpu.matmul %16, %11, %cst_15 {dimension_numbers = #tpu.dot_dimension_numbers<[1], [0], [0], [1], [0, 0, 1, 1], [], []>} : vector<32x64xf32>, vector<64x128xf32>, vector<32x128xf32> -> vector<32x128xf32>
    %18 = arith.addf %15, %17 : vector<32x128xf32>
    %c0_16 = arith.constant 0 : index
    %c0_17 = arith.constant 0 : index
    %c0_18 = arith.constant 0 : index
    %19 = vector.load %arg7[%c0_16, %c0_17, %c0_18] : memref<2x128x128xf32, #tpu.memory_space<vmem>>, vector<1x128x128xf32>
    %20 = vector.shape_cast %19 : vector<1x128x128xf32> to vector<128x128xf32>
    %cst_19 = arith.constant dense<0.000000e+00> : vector<32x128xf32>
    %21 = tpu.matmul %18, %20, %cst_19 {dimension_numbers = #tpu.dot_dimension_numbers<[1], [0], [0], [1], [0, 0, 1, 1], [], []>} : vector<32x128xf32>, vector<128x128xf32>, vector<32x128xf32> -> vector<32x128xf32>
    %c0_20 = arith.constant 0 : index
    %c0_21 = arith.constant 0 : index
    %c0_22 = arith.constant 0 : index
    %22 = vector.load %arg8[%c0_20, %c0_21, %c0_22] : memref<2x1x128xf32, #tpu.memory_space<vmem>>, vector<1x1x128xf32>
    %23 = vector.shape_cast %22 : vector<1x1x128xf32> to vector<1x128xf32>
    %24 = vector.broadcast %23 : vector<1x128xf32> to vector<32x128xf32>
    %25 = arith.addf %21, %24 : vector<32x128xf32>
    %cst_23 = arith.constant 0.000000e+00 : f32
    %26 = vector.broadcast %cst_23 : f32 to vector<32x128xf32>
    %27 = arith.maximumf %25, %26 : vector<32x128xf32>
    %c0_24 = arith.constant 0 : index
    %c0_25 = arith.constant 0 : index
    %c0_26 = arith.constant 0 : index
    %28 = vector.load %arg9[%c0_24, %c0_25, %c0_26] : memref<2x128x128xf32, #tpu.memory_space<vmem>>, vector<1x128x128xf32>
    %29 = vector.shape_cast %28 : vector<1x128x128xf32> to vector<128x128xf32>
    %cst_27 = arith.constant dense<0.000000e+00> : vector<32x128xf32>
    %30 = tpu.matmul %27, %29, %cst_27 {dimension_numbers = #tpu.dot_dimension_numbers<[1], [0], [0], [1], [0, 0, 1, 1], [], []>} : vector<32x128xf32>, vector<128x128xf32>, vector<32x128xf32> -> vector<32x128xf32>
    %c0_28 = arith.constant 0 : index
    %c0_29 = arith.constant 0 : index
    %c0_30 = arith.constant 0 : index
    %31 = vector.load %arg10[%c0_28, %c0_29, %c0_30] : memref<2x1x128xf32, #tpu.memory_space<vmem>>, vector<1x1x128xf32>
    %32 = vector.shape_cast %31 : vector<1x1x128xf32> to vector<1x128xf32>
    %33 = vector.broadcast %32 : vector<1x128xf32> to vector<32x128xf32>
    %34 = arith.addf %30, %33 : vector<32x128xf32>
    %c0_31 = arith.constant 0 : index
    %c0_32 = arith.constant 0 : index
    %35 = vector.load %arg5[%c0_31, %c0_32] : memref<64x32xf32, #tpu.memory_space<vmem>>, vector<64x32xf32>
    %cst_33 = arith.constant dense<0.000000e+00> : vector<64x128xf32>
    %36 = tpu.matmul %35, %34, %cst_33 {dimension_numbers = #tpu.dot_dimension_numbers<[1], [0], [0], [1], [0, 0, 1, 1], [], []>} : vector<64x32xf32>, vector<32x128xf32>, vector<64x128xf32> -> vector<64x128xf32>
    %c0_34 = arith.constant 0 : index
    %c0_35 = arith.constant 0 : index
    %37 = vector.load %arg4[%c0_34, %c0_35] : memref<64x128xf32, #tpu.memory_space<vmem>>, vector<64x128xf32>
    %38 = arith.addf %36, %37 : vector<64x128xf32>
    %cst_36 = arith.constant 0.000000e+00 : f32
    %39 = vector.broadcast %cst_36 : f32 to vector<64x128xf32>
    %40 = arith.maximumf %38, %39 : vector<64x128xf32>
    %c1 = arith.constant 1 : index
    %41 = memref.load %arg0[%c1] : memref<2xf32, #tpu.memory_space<smem>>
    %cst_37 = arith.constant 1.000000e+00 : f32
    %42 = arith.addf %cst_37, %41 : f32
    %43 = vector.broadcast %42 : f32 to vector<32x128xf32>
    %44 = arith.mulf %43, %34 : vector<32x128xf32>
    %c0_38 = arith.constant 0 : index
    %c0_39 = arith.constant 0 : index
    %45 = vector.load %arg6[%c0_38, %c0_39] : memref<32x64xf32, #tpu.memory_space<vmem>>, vector<32x64xf32>
    %cst_40 = arith.constant dense<0.000000e+00> : vector<32x128xf32>
    %46 = tpu.matmul %45, %40, %cst_40 {dimension_numbers = #tpu.dot_dimension_numbers<[1], [0], [0], [1], [0, 0, 1, 1], [], []>} : vector<32x64xf32>, vector<64x128xf32>, vector<32x128xf32> -> vector<32x128xf32>
    %47 = arith.addf %44, %46 : vector<32x128xf32>
    %c1_41 = arith.constant 1 : index
    %c0_42 = arith.constant 0 : index
    %c0_43 = arith.constant 0 : index
    %48 = vector.load %arg7[%c1_41, %c0_42, %c0_43] : memref<2x128x128xf32, #tpu.memory_space<vmem>>, vector<1x128x128xf32>
    %49 = vector.shape_cast %48 : vector<1x128x128xf32> to vector<128x128xf32>
    %cst_44 = arith.constant dense<0.000000e+00> : vector<32x128xf32>
    %50 = tpu.matmul %47, %49, %cst_44 {dimension_numbers = #tpu.dot_dimension_numbers<[1], [0], [0], [1], [0, 0, 1, 1], [], []>} : vector<32x128xf32>, vector<128x128xf32>, vector<32x128xf32> -> vector<32x128xf32>
    %c1_45 = arith.constant 1 : index
    %c0_46 = arith.constant 0 : index
    %c0_47 = arith.constant 0 : index
    %51 = vector.load %arg8[%c1_45, %c0_46, %c0_47] : memref<2x1x128xf32, #tpu.memory_space<vmem>>, vector<1x1x128xf32>
    %52 = vector.shape_cast %51 : vector<1x1x128xf32> to vector<1x128xf32>
    %53 = vector.broadcast %52 : vector<1x128xf32> to vector<32x128xf32>
    %54 = arith.addf %50, %53 : vector<32x128xf32>
    %cst_48 = arith.constant 0.000000e+00 : f32
    %55 = vector.broadcast %cst_48 : f32 to vector<32x128xf32>
    %56 = arith.maximumf %54, %55 : vector<32x128xf32>
    %c1_49 = arith.constant 1 : index
    %c0_50 = arith.constant 0 : index
    %c0_51 = arith.constant 0 : index
    %57 = vector.load %arg9[%c1_49, %c0_50, %c0_51] : memref<2x128x128xf32, #tpu.memory_space<vmem>>, vector<1x128x128xf32>
    %58 = vector.shape_cast %57 : vector<1x128x128xf32> to vector<128x128xf32>
    %cst_52 = arith.constant dense<0.000000e+00> : vector<32x128xf32>
    %59 = tpu.matmul %56, %58, %cst_52 {dimension_numbers = #tpu.dot_dimension_numbers<[1], [0], [0], [1], [0, 0, 1, 1], [], []>} : vector<32x128xf32>, vector<128x128xf32>, vector<32x128xf32> -> vector<32x128xf32>
    %c1_53 = arith.constant 1 : index
    %c0_54 = arith.constant 0 : index
    %c0_55 = arith.constant 0 : index
    %60 = vector.load %arg10[%c1_53, %c0_54, %c0_55] : memref<2x1x128xf32, #tpu.memory_space<vmem>>, vector<1x1x128xf32>
    %61 = vector.shape_cast %60 : vector<1x1x128xf32> to vector<1x128xf32>
    %62 = vector.broadcast %61 : vector<1x128xf32> to vector<32x128xf32>
    %63 = arith.addf %59, %62 : vector<32x128xf32>
    %c0_56 = arith.constant 0 : index
    %c0_57 = arith.constant 0 : index
    %64 = vector.load %arg15[%c0_56, %c0_57] : memref<8x32xf32, #tpu.memory_space<vmem>>, vector<8x32xf32>
    %cst_58 = arith.constant dense<0.000000e+00> : vector<8x128xf32>
    %65 = tpu.matmul %64, %63, %cst_58 {dimension_numbers = #tpu.dot_dimension_numbers<[1], [0], [0], [1], [0, 0, 1, 1], [], []>} : vector<8x32xf32>, vector<32x128xf32>, vector<8x128xf32> -> vector<8x128xf32>
    %c0_59 = arith.constant 0 : index
    %c0_60 = arith.constant 0 : index
    %66 = vector.load %arg11[%c0_59, %c0_60] : memref<128x128xf32, #tpu.memory_space<vmem>>, vector<128x128xf32>
    %cst_61 = arith.constant dense<0.000000e+00> : vector<8x128xf32>
    %67 = tpu.matmul %65, %66, %cst_61 {dimension_numbers = #tpu.dot_dimension_numbers<[1], [0], [0], [1], [0, 0, 1, 1], [], []>} : vector<8x128xf32>, vector<128x128xf32>, vector<8x128xf32> -> vector<8x128xf32>
    %c0_62 = arith.constant 0 : index
    %c0_63 = arith.constant 0 : index
    %68 = vector.load %arg12[%c0_62, %c0_63] : memref<1x128xf32, #tpu.memory_space<vmem>>, vector<1x128xf32>
    %69 = vector.broadcast %68 : vector<1x128xf32> to vector<8x128xf32>
    %70 = arith.addf %67, %69 : vector<8x128xf32>
    %cst_64 = arith.constant 0.000000e+00 : f32
    %71 = vector.broadcast %cst_64 : f32 to vector<8x128xf32>
    %72 = arith.maximumf %70, %71 : vector<8x128xf32>
    %c0_65 = arith.constant 0 : index
    %c0_66 = arith.constant 0 : index
    %73 = vector.load %arg13[%c0_65, %c0_66] : memref<128x128xf32, #tpu.memory_space<vmem>>, vector<128x128xf32>
    %cst_67 = arith.constant dense<0.000000e+00> : vector<8x128xf32>
    %74 = tpu.matmul %72, %73, %cst_67 {dimension_numbers = #tpu.dot_dimension_numbers<[1], [0], [0], [1], [0, 0, 1, 1], [], []>} : vector<8x128xf32>, vector<128x128xf32>, vector<8x128xf32> -> vector<8x128xf32>
    %c0_68 = arith.constant 0 : index
    %c0_69 = arith.constant 0 : index
    %75 = vector.load %arg14[%c0_68, %c0_69] : memref<1x128xf32, #tpu.memory_space<vmem>>, vector<1x128xf32>
    %76 = vector.broadcast %75 : vector<1x128xf32> to vector<8x128xf32>
    %77 = arith.addf %74, %76 : vector<8x128xf32>
    %c0_70 = arith.constant 0 : index
    %c0_71 = arith.constant 0 : index
    %78 = vector.load %arg16[%c0_70, %c0_71] : memref<8x128xf32, #tpu.memory_space<vmem>>, vector<8x128xf32>
    tpu.vector_store %arg16[%c0_70, %c0_71], %77 {strides = array<i32>} : memref<8x128xf32, #tpu.memory_space<vmem>>, vector<8x128xf32>,
    return
  }
}

</mosaic_0001>

<llo_original>
// kernel: gine_base_forward.1
$region0: #{gine_base_forward.1}
  #allocation0 [shape = 'u32[]', space=smem, size = 0x4, offset = 0x4, fixed_abs, tag = 'smem constant byte address 0x4 - core index']
  #allocation1 [shape = 'u32[72,128]{1,0:T(1,128)}', space=vmem, size = 0x9000, scoped, tag = 'internal scratch']
  %s0 = inlined_call_operand.vmem [shape: f32[2], index: 0, kind: input, shape index: {}]
  %s1 = inlined_call_operand.vmem [shape: f32[32,128], index: 1, kind: input, shape index: {}]
  %s2 = inlined_call_operand.vmem [shape: f32[128,128], index: 2, kind: input, shape index: {}]
  %s3 = inlined_call_operand.vmem [shape: f32[1,128], index: 3, kind: input, shape index: {}]
  %s4 = inlined_call_operand.vmem [shape: f32[64,128], index: 4, kind: input, shape index: {}]
  %s5 = inlined_call_operand.vmem [shape: f32[64,32], index: 5, kind: input, shape index: {}]
  %s6 = inlined_call_operand.vmem [shape: f32[32,64], index: 6, kind: input, shape index: {}]
  %s7 = inlined_call_operand.vmem [shape: f32[2,128,128], index: 7, kind: input, shape index: {}]
  %s8 = inlined_call_operand.vmem [shape: f32[2,1,128], index: 8, kind: input, shape index: {}]
  %s9 = inlined_call_operand.vmem [shape: f32[2,128,128], index: 9, kind: input, shape index: {}]
  %s10 = inlined_call_operand.vmem [shape: f32[2,1,128], index: 10, kind: input, shape index: {}]
  %s11 = inlined_call_operand.vmem [shape: f32[128,128], index: 11, kind: input, shape index: {}]
  %s12 = inlined_call_operand.vmem [shape: f32[1,128], index: 12, kind: input, shape index: {}]
  %s13 = inlined_call_operand.vmem [shape: f32[128,128], index: 13, kind: input, shape index: {}]
  %s14 = inlined_call_operand.vmem [shape: f32[1,128], index: 14, kind: input, shape index: {}]
  %s15 = inlined_call_operand.vmem [shape: f32[8,32], index: 15, kind: input, shape index: {}]
  %s16 = inlined_call_operand.vmem [shape: f32[8,128], index: 16, kind: output, shape index: {}]
  %s17 = sld [smem:[#allocation0]]
  $region78: #{gine_base_forward.1} parent=0
    _
  %s19 = ssub.s32 1, %s17
  %s20 = scalar_select 0, %s19, %s17
  $region1: #{gine_base_forward.1} parent=0
    #allocation2 [shape = 'u8[512]{0}', space=smem, size = 0x200, scoped, tag = 'input window, operand 0, single buffered']
    #allocation3 [shape = 's32[1]{0}', space=sflag, size = 0x4, scoped, tag = 'scoped memory for gine_base_forward.1']
    %21 = vsyncpa [#allocation3], 0
    // Predicated region
    $region2: #{gine_base_forward.1} parent=1 // pred_check
      _
    $region3: #{gine_base_forward.1} parent=1 // pred_check_branch
      %23 = sbr.rel (0) target = $region5
    $region4: #{gine_base_forward.1} parent=1 // pred_region
      %25 = vsyncadd [#allocation3], 0
      %s27 = sshll.u32 %s0, 4
      %s28 = int_to_ptr.vmem [resolvable:$true] %s27
      %30 = dma.vmem_to_smem %s28, 16, [#allocation2], [#allocation3]
    $region5: #{gine_base_forward.1} parent=1 // pred_fallthru
      _
    // Predicated region
    $region6: #{gine_base_forward.1} parent=1 // pred_check
      _
    $region7: #{gine_base_forward.1} parent=1 // pred_check_branch
      %32 = sbr.rel (0) target = $region9
    $region8: #{gine_base_forward.1} parent=1 // pred_region
      _
    $region9: #{gine_base_forward.1} parent=1 // pred_fallthru
      _
    // Predicated region
    $region10: #{gine_base_forward.1} parent=1 // pred_check
      _
    $region11: #{gine_base_forward.1} parent=1 // pred_check_branch
      %34 = sbr.rel (0) target = $region13
    $region12: #{gine_base_forward.1} parent=1 // pred_region
      _
    $region13: #{gine_base_forward.1} parent=1 // pred_fallthru
      _
    // Predicated region
    $region14: #{gine_base_forward.1} parent=1 // pred_check
      _
    $region15: #{gine_base_forward.1} parent=1 // pred_check_branch
      %36 = sbr.rel (0) target = $region17
    $region16: #{gine_base_forward.1} parent=1 // pred_region
      _
    $region17: #{gine_base_forward.1} parent=1 // pred_fallthru
      _
    // Predicated region
    $region18: #{gine_base_forward.1} parent=1 // pred_check
      _
    $region19: #{gine_base_forward.1} parent=1 // pred_check_branch
      %38 = sbr.rel (0) target = $region21
    $region20: #{gine_base_forward.1} parent=1 // pred_region
      _
    $region21: #{gine_base_forward.1} parent=1 // pred_fallthru
      _
    // Predicated region
    $region22: #{gine_base_forward.1} parent=1 // pred_check
      _
    $region23: #{gine_base_forward.1} parent=1 // pred_check_branch
      %40 = sbr.rel (0) target = $region25
    $region24: #{gine_base_forward.1} parent=1 // pred_region
      _
    $region25: #{gine_base_forward.1} parent=1 // pred_fallthru
      _
    // Predicated region
    $region26: #{gine_base_forward.1} parent=1 // pred_check
      _
    $region27: #{gine_base_forward.1} parent=1 // pred_check_branch
      %42 = sbr.rel (0) target = $region29
    $region28: #{gine_base_forward.1} parent=1 // pred_region
      _
    $region29: #{gine_base_forward.1} parent=1 // pred_fallthru
      _
    // Predicated region
    $region30: #{gine_base_forward.1} parent=1 // pred_check
      _
    $region31: #{gine_base_forward.1} parent=1 // pred_check_branch
      %44 = sbr.rel (0) target = $region33
    $region32: #{gine_base_forward.1} parent=1 // pred_region
      _
    $region33: #{gine_base_forward.1} parent=1 // pred_fallthru
      _
    // Predicated region
    $region34: #{gine_base_forward.1} parent=1 // pred_check
      _
    $region35: #{gine_base_forward.1} parent=1 // pred_check_branch
      %46 = sbr.rel (0) target = $region37
    $region36: #{gine_base_forward.1} parent=1 // pred_region
      _
    $region37: #{gine_base_forward.1} parent=1 // pred_fallthru
      _
    // Predicated region
    $region38: #{gine_base_forward.1} parent=1 // pred_check
      _
    $region39: #{gine_base_forward.1} parent=1 // pred_check_branch
      %48 = sbr.rel (0) target = $region41
    $region40: #{gine_base_forward.1} parent=1 // pred_region
      _
    $region41: #{gine_base_forward.1} parent=1 // pred_fallthru
      _
    // Predicated region
    $region42: #{gine_base_forward.1} parent=1 // pred_check
      _
    $region43: #{gine_base_forward.1} parent=1 // pred_check_branch
      %50 = sbr.rel (0) target = $region45
    $region44: #{gine_base_forward.1} parent=1 // pred_region
      _
    $region45: #{gine_base_forward.1} parent=1 // pred_fallthru
      _
    // Predicated region
    $region46: #{gine_base_forward.1} parent=1 // pred_check
      _
    $region47: #{gine_base_forward.1} parent=1 // pred_check_branch
      %52 = sbr.rel (0) target = $region49
    $region48: #{gine_base_forward.1} parent=1 // pred_region
      _
    $region49: #{gine_base_forward.1} parent=1 // pred_fallthru
      _
    // Predicated region
    $region50: #{gine_base_forward.1} parent=1 // pred_check
      _
    $region51: #{gine_base_forward.1} parent=1 // pred_check_branch
      %54 = sbr.rel (0) target = $region53
    $region52: #{gine_base_forward.1} parent=1 // pred_region
      _
    $region53: #{gine_base_forward.1} parent=1 // pred_fallthru
      _
    // Predicated region
    $region54: #{gine_base_forward.1} parent=1 // pred_check
      _
    $region55: #{gine_base_forward.1} parent=1 // pred_check_branch
      %56 = sbr.rel (0) target = $region57
    $region56: #{gine_base_forward.1} parent=1 // pred_region
      _
    $region57: #{gine_base_forward.1} parent=1 // pred_fallthru
      _
    // Predicated region
    $region58: #{gine_base_forward.1} parent=1 // pred_check
      _
    $region59: #{gine_base_forward.1} parent=1 // pred_check_branch
      %58 = sbr.rel (0) target = $region61
    $region60: #{gine_base_forward.1} parent=1 // pred_region
      _
    $region61: #{gine_base_forward.1} parent=1 // pred_fallthru
      _
    // Predicated region
    $region62: #{gine_base_forward.1} parent=1 // pred_check
      _
    $region63: #{gine_base_forward.1} parent=1 // pred_check_branch
      %60 = sbr.rel (0) target = $region65
    $region64: #{gine_base_forward.1} parent=1 // pred_region
      _
    $region65: #{gine_base_forward.1} parent=1 // pred_fallthru
      _
    // Predicated region
    $region66: #{gine_base_forward.1} parent=1 // pred_check
      _
    $region67: #{gine_base_forward.1} parent=1 // pred_check_branch
      %62 = sbr.rel (0) target = $region69
    $region68: #{gine_base_forward.1} parent=1 // pred_region
      %64 = dma.done [#allocation3], 16
    $region69: #{gine_base_forward.1} parent=1 // pred_fallthru
      _
    %65 = sfence
    %v66 = vld [vmem:[%s1] sm:$0xff]
    %v67 = vld [vmem:[%s1 + $0x8] sm:$0xff]
    %v68 = vld [vmem:[%s1 + $0x10] sm:$0xff]
    %v69 = vld [vmem:[%s1 + $0x18] sm:$0xff]
    %v70 = vld [vmem:[%s2] sm:$0xff]
    %v71 = vld [vmem:[%s2 + $0x8] sm:$0xff]
    %v72 = vld [vmem:[%s2 + $0x10] sm:$0xff]
    %v73 = vld [vmem:[%s2 + $0x18] sm:$0xff]
    %v74 = vld [vmem:[%s2 + $0x20] sm:$0xff]
    %v75 = vld [vmem:[%s2 + $0x28] sm:$0xff]
    %v76 = vld [vmem:[%s2 + $0x30] sm:$0xff]
    %v77 = vld [vmem:[%s2 + $0x38] sm:$0xff]
    %v78 = vld [vmem:[%s2 + $0x40] sm:$0xff]
    %v79 = vld [vmem:[%s2 + $0x48] sm:$0xff]
    %v80 = vld [vmem:[%s2 + $0x50] sm:$0xff]
    %v81 = vld [vmem:[%s2 + $0x58] sm:$0xff]
    %v82 = vld [vmem:[%s2 + $0x60] sm:$0xff]
    %v83 = vld [vmem:[%s2 + $0x68] sm:$0xff]
    %v84 = vld [vmem:[%s2 + $0x70] sm:$0xff]
    %v85 = vld [vmem:[%s2 + $0x78] sm:$0xff]
    %v86 = vld [vmem:[%s3] sm:$0x1]
    %v88 = vperm.slane %v86, 0
    %90 = vmatpush.msra.mxu0 %v85
    %91 = vmatpush.msra.mxu0 %v84
    %92 = vmatpush.msra.mxu0 %v83
    %93 = vmatpush.msra.mxu0 %v82
    %94 = vmatpush.msra.mxu0 %v81
    %95 = vmatpush.msra.mxu0 %v80
    %96 = vmatpush.msra.mxu0 %v79
    %97 = vmatpush.msra.mxu0 %v78
    %98 = vmatpush.msra.mxu0 %v77
    %99 = vmatpush.msra.mxu0 %v76
    %100 = vmatpush.msra.mxu0 %v75
    %101 = vmatpush.msra.mxu0 %v74
    %102 = vmatpush.msra.mxu0 %v73
    %103 = vmatpush.msra.mxu0 %v72
    %104 = vmatpush.msra.mxu0 %v71
    %105 = vmatpush.msra.mxu0 %v70
    %106 = vmatmul.f32.gmra.mxu0 %v66
    %v107 = vpop.f32.mrf.mxu0
    %v108 = vadd.f32 %v88, %v107
    %109 = vmatmul.f32.gmra.mxu0 %v67
    %v110 = vpop.f32.mrf.mxu0
    %v111 = vadd.f32 %v88, %v110
    %112 = vmatmul.f32.gmra.mxu0 %v68
    %v113 = vpop.f32.mrf.mxu0
    %v114 = vadd.f32 %v88, %v113
    %115 = vmatmul.f32.gmra.mxu0 %v69
    %v116 = vpop.f32.mrf.mxu0
    %v117 = vadd.f32 %v88, %v116
    %118 = vdwg.mxu0
    %v119 = vld [vmem:[%s5] sm:$0xff]
    %v120 = vld [vmem:[%s5 + $0x8] sm:$0xff]
    %v121 = vld [vmem:[%s5 + $0x10] sm:$0xff]
    %v122 = vld [vmem:[%s5 + $0x18] sm:$0xff]
    %v123 = vld [vmem:[%s5 + $0x20] sm:$0xff]
    %v124 = vld [vmem:[%s5 + $0x28] sm:$0xff]
    %v125 = vld [vmem:[%s5 + $0x30] sm:$0xff]
    %v126 = vld [vmem:[%s5 + $0x38] sm:$0xff]
    %v127 = vld [vmem:[%s4] sm:$0xff]
    %v128 = vld [vmem:[%s4 + $0x8] sm:$0xff]
    %v129 = vld [vmem:[%s4 + $0x10] sm:$0xff]
    %v130 = vld [vmem:[%s4 + $0x18] sm:$0xff]
    %v131 = vld [vmem:[%s4 + $0x20] sm:$0xff]
    %v132 = vld [vmem:[%s4 + $0x28] sm:$0xff]
    %v133 = vld [vmem:[%s4 + $0x30] sm:$0xff]
    %v134 = vld [vmem:[%s4 + $0x38] sm:$0xff]
    %vm135 = vcmask 261120
    %v137 = vsel %vm135, %v119, 0
    %v140 = vsel %vm135, %v120, 0
    %v143 = vsel %vm135, %v121, 0
    %v146 = vsel %vm135, %v122, 0
    %v149 = vsel %vm135, %v123, 0
    %v152 = vsel %vm135, %v124, 0
    %v155 = vsel %vm135, %v125, 0
    %v158 = vsel %vm135, %v126, 0
    %160 = vmatpush.msra.mxu0 0.0
    %161 = vmatpush.msra.mxu0 0.0
    %162 = vmatpush.msra.mxu0 0.0
    %163 = vmatpush.msra.mxu0 0.0
    %164 = vmatpush.msra.mxu0 0.0
    %165 = vmatpush.msra.mxu0 0.0
    %166 = vmatpush.msra.mxu0 0.0
    %167 = vmatpush.msra.mxu0 0.0
    %168 = vmatpush.msra.mxu0 0.0
    %169 = vmatpush.msra.mxu0 0.0
    %170 = vmatpush.msra.mxu0 0.0
    %171 = vmatpush.msra.mxu0 0.0
    %172 = vmatpush.msra.mxu0 %v117
    %173 = vmatpush.msra.mxu0 %v114
    %174 = vmatpush.msra.mxu0 %v111
    %175 = vmatpush.msra.mxu0 %v108
    %176 = vmatmul.f32.gmra.mxu0 %v137
    %v177 = vpop.f32.mrf.mxu0
    %v178 = vadd.f32 %v127, %v177
    %179 = vmatmul.f32.gmra.mxu0 %v140
    %v180 = vpop.f32.mrf.mxu0
    %v181 = vadd.f32 %v128, %v180
    %182 = vmatmul.f32.gmra.mxu0 %v143
    %v183 = vpop.f32.mrf.mxu0
    %v184 = vadd.f32 %v129, %v183
    %185 = vmatmul.f32.gmra.mxu0 %v146
    %v186 = vpop.f32.mrf.mxu0
    %v187 = vadd.f32 %v130, %v186
    %188 = vmatmul.f32.gmra.mxu0 %v149
    %v189 = vpop.f32.mrf.mxu0
    %v190 = vadd.f32 %v131, %v189
    %191 = vmatmul.f32.gmra.mxu0 %v152
    %v192 = vpop.f32.mrf.mxu0
    %v193 = vadd.f32 %v132, %v192
    %194 = vmatmul.f32.gmra.mxu0 %v155
    %v195 = vpop.f32.mrf.mxu0
    %v196 = vadd.f32 %v133, %v195
    %197 = vmatmul.f32.gmra.mxu0 %v158
    %v198 = vpop.f32.mrf.mxu0
    %v199 = vadd.f32 %v134, %v198
    %200 = vdwg.mxu0
    %v201 = vmax.f32 %v178, 0.0
    %v202 = vmax.f32 %v181, 0.0
    %v203 = vmax.f32 %v184, 0.0
    %v204 = vmax.f32 %v187, 0.0
    %v205 = vmax.f32 %v190, 0.0
    %v206 = vmax.f32 %v193, 0.0
    %v207 = vmax.f32 %v196, 0.0
    %v208 = vmax.f32 %v199, 0.0
    %s209 = sld [smem:[#allocation2]]
    %s210 = sadd.f32 %s209, 1.0
    %v211 = vstv %s210
    %v212 = vmul.f32 %v211, %v108
    %v213 = vmul.f32 %v211, %v111
    %v214 = vmul.f32 %v211, %v114
    %v215 = vmul.f32 %v211, %v117
    %v216 = vld [vmem:[%s6] sm:$0xff]
    %v217 = vld [vmem:[%s6 + $0x8] sm:$0xff]
    %v218 = vld [vmem:[%s6 + $0x10] sm:$0xff]
    %v219 = vld [vmem:[%s6 + $0x18] sm:$0xff]
    %vm220 = vcmask 523264
    %v222 = vsel %vm220, %v216, 0
    %v225 = vsel %vm220, %v217, 0
    %v228 = vsel %vm220, %v218, 0
    %v231 = vsel %vm220, %v219, 0
    %233 = vmatpush.msra.mxu0 0.0
    %234 = vmatpush.msra.mxu0 0.0
    %235 = vmatpush.msra.mxu0 0.0
    %236 = vmatpush.msra.mxu0 0.0
    %237 = vmatpush.msra.mxu0 0.0
    %238 = vmatpush.msra.mxu0 0.0
    %239 = vmatpush.msra.mxu0 0.0
    %240 = vmatpush.msra.mxu0 0.0
    %241 = vmatpush.msra.mxu0 %v208
    %242 = vmatpush.msra.mxu0 %v207
    %243 = vmatpush.msra.mxu0 %v206
    %244 = vmatpush.msra.mxu0 %v205
    %245 = vmatpush.msra.mxu0 %v204
    %246 = vmatpush.msra.mxu0 %v203
    %247 = vmatpush.msra.mxu0 %v202
    %248 = vmatpush.msra.mxu0 %v201
    %249 = vmatmul.f32.gmra.mxu0 %v222
    %v250 = vpop.f32.mrf.mxu0
    %v251 = vadd.f32 0.0, %v250
    %252 = vmatmul.f32.gmra.mxu0 %v225
    %v253 = vpop.f32.mrf.mxu0
    %v254 = vadd.f32 0.0, %v253
    %255 = vmatmul.f32.gmra.mxu0 %v228
    %v256 = vpop.f32.mrf.mxu0
    %v257 = vadd.f32 0.0, %v256
    %258 = vmatmul.f32.gmra.mxu0 %v231
    %v259 = vpop.f32.mrf.mxu0
    %v260 = vadd.f32 0.0, %v259
    %261 = vdwg.mxu0
    %v262 = vadd.f32 %v212, %v251
    %v263 = vadd.f32 %v213, %v254
    %v264 = vadd.f32 %v214, %v257
    %v265 = vadd.f32 %v215, %v260
    %v266 = vld [vmem:[%s7] sm:$0xff]
    %v267 = vld [vmem:[%s7 + $0x8] sm:$0xff]
    %v268 = vld [vmem:[%s7 + $0x10] sm:$0xff]
    %v269 = vld [vmem:[%s7 + $0x18] sm:$0xff]
    %v270 = vld [vmem:[%s7 + $0x20] sm:$0xff]
    %v271 = vld [vmem:[%s7 + $0x28] sm:$0xff]
    %v272 = vld [vmem:[%s7 + $0x30] sm:$0xff]
    %v273 = vld [vmem:[%s7 + $0x38] sm:$0xff]
    %v274 = vld [vmem:[%s7 + $0x40] sm:$0xff]
    %v275 = vld [vmem:[%s7 + $0x48] sm:$0xff]
    %v276 = vld [vmem:[%s7 + $0x50] sm:$0xff]
    %v277 = vld [vmem:[%s7 + $0x58] sm:$0xff]
    %v278 = vld [vmem:[%s7 + $0x60] sm:$0xff]
    %v279 = vld [vmem:[%s7 + $0x68] sm:$0xff]
    %v280 = vld [vmem:[%s7 + $0x70] sm:$0xff]
    %v281 = vld [vmem:[%s7 + $0x78] sm:$0xff]
    %v282 = vld [vmem:[%s8] sm:$0x1]
    %v284 = vperm.slane %v282, 0
    %286 = vmatpush.msra.mxu0 %v281
    %287 = vmatpush.msra.mxu0 %v280
    %288 = vmatpush.msra.mxu0 %v279
    %289 = vmatpush.msra.mxu0 %v278
    %290 = vmatpush.msra.mxu0 %v277
    %291 = vmatpush.msra.mxu0 %v276
    %292 = vmatpush.msra.mxu0 %v275
    %293 = vmatpush.msra.mxu0 %v274
    %294 = vmatpush.msra.mxu0 %v273
    %295 = vmatpush.msra.mxu0 %v272
    %296 = vmatpush.msra.mxu0 %v271
    %297 = vmatpush.msra.mxu0 %v270
    %298 = vmatpush.msra.mxu0 %v269
    %299 = vmatpush.msra.mxu0 %v268
    %300 = vmatpush.msra.mxu0 %v267
    %301 = vmatpush.msra.mxu0 %v266
    %302 = vmatmul.f32.gmra.mxu0 %v262
    %v303 = vpop.f32.mrf.mxu0
    %v304 = vadd.f32 %v284, %v303
    %305 = vmatmul.f32.gmra.mxu0 %v263
    %v306 = vpop.f32.mrf.mxu0
    %v307 = vadd.f32 %v284, %v306
    %308 = vmatmul.f32.gmra.mxu0 %v264
    %v309 = vpop.f32.mrf.mxu0
    %v310 = vadd.f32 %v284, %v309
    %311 = vmatmul.f32.gmra.mxu0 %v265
    %v312 = vpop.f32.mrf.mxu0
    %v313 = vadd.f32 %v284, %v312
    %314 = vdwg.mxu0
    %v315 = vmax.f32 %v304, 0.0
    %v316 = vmax.f32 %v307, 0.0
    %v317 = vmax.f32 %v310, 0.0
    %v318 = vmax.f32 %v313, 0.0
    %v319 = vld [vmem:[%s9] sm:$0xff]
    %v320 = vld [vmem:[%s9 + $0x8] sm:$0xff]
    %v321 = vld [vmem:[%s9 + $0x10] sm:$0xff]
    %v322 = vld [vmem:[%s9 + $0x18] sm:$0xff]
    %v323 = vld [vmem:[%s9 + $0x20] sm:$0xff]
    %v324 = vld [vmem:[%s9 + $0x28] sm:$0xff]
    %v325 = vld [vmem:[%s9 + $0x30] sm:$0xff]
    %v326 = vld [vmem:[%s9 + $0x38] sm:$0xff]
    %v327 = vld [vmem:[%s9 + $0x40] sm:$0xff]
    %v328 = vld [vmem:[%s9 + $0x48] sm:$0xff]
    %v329 = vld [vmem:[%s9 + $0x50] sm:$0xff]
    %v330 = vld [vmem:[%s9 + $0x58] sm:$0xff]
    %v331 = vld [vmem:[%s9 + $0x60] sm:$0xff]
    %v332 = vld [vmem:[%s9 + $0x68] sm:$0xff]
    %v333 = vld [vmem:[%s9 + $0x70] sm:$0xff]
    %v334 = vld [vmem:[%s9 + $0x78] sm:$0xff]
    %v335 = vld [vmem:[%s10] sm:$0x1]
    %v337 = vperm.slane %v335, 0
    %339 = vmatpush.msra.mxu0 %v334
    %340 = vmatpush.msra.mxu0 %v333
    %341 = vmatpush.msra.mxu0 %v332
    %342 = vmatpush.msra.mxu0 %v331
    %343 = vmatpush.msra.mxu0 %v330
    %344 = vmatpush.msra.mxu0 %v329
    %345 = vmatpush.msra.mxu0 %v328
    %346 = vmatpush.msra.mxu0 %v327
    %347 = vmatpush.msra.mxu0 %v326
    %348 = vmatpush.msra.mxu0 %v325
    %349 = vmatpush.msra.mxu0 %v324
    %350 = vmatpush.msra.mxu0 %v323
    %351 = vmatpush.msra.mxu0 %v322
    %352 = vmatpush.msra.mxu0 %v321
    %353 = vmatpush.msra.mxu0 %v320
    %354 = vmatpush.msra.mxu0 %v319
    %355 = vmatmul.f32.gmra.mxu0 %v315
    %v356 = vpop.f32.mrf.mxu0
    %v357 = vadd.f32 %v337, %v356
    %358 = vmatmul.f32.gmra.mxu0 %v316
    %v359 = vpop.f32.mrf.mxu0
    %v360 = vadd.f32 %v337, %v359
    %361 = vmatmul.f32.gmra.mxu0 %v317
    %v362 = vpop.f32.mrf.mxu0
    %v363 = vadd.f32 %v337, %v362
    %364 = vmatmul.f32.gmra.mxu0 %v318
    %v365 = vpop.f32.mrf.mxu0
    %v366 = vadd.f32 %v337, %v365
    %367 = vdwg.mxu0
    %368 = vmatpush.msra.mxu0 0.0
    %369 = vmatpush.msra.mxu0 0.0
    %370 = vmatpush.msra.mxu0 0.0
    %371 = vmatpush.msra.mxu0 0.0
    %372 = vmatpush.msra.mxu0 0.0
    %373 = vmatpush.msra.mxu0 0.0
    %374 = vmatpush.msra.mxu0 0.0
    %375 = vmatpush.msra.mxu0 0.0
    %376 = vmatpush.msra.mxu0 0.0
    %377 = vmatpush.msra.mxu0 0.0
    %378 = vmatpush.msra.mxu0 0.0
    %379 = vmatpush.msra.mxu0 0.0
    %380 = vmatpush.msra.mxu0 %v366
    %381 = vmatpush.msra.mxu0 %v363
    %382 = vmatpush.msra.mxu0 %v360
    %383 = vmatpush.msra.mxu0 %v357
    %384 = vmatmul.f32.gmra.mxu0 %v137
    %v385 = vpop.f32.mrf.mxu0
    %v386 = vadd.f32 %v127, %v385
    %387 = vmatmul.f32.gmra.mxu0 %v140
    %v388 = vpop.f32.mrf.mxu0
    %v389 = vadd.f32 %v128, %v388
    %390 = vmatmul.f32.gmra.mxu0 %v143
    %v391 = vpop.f32.mrf.mxu0
    %v392 = vadd.f32 %v129, %v391
    %393 = vmatmul.f32.gmra.mxu0 %v146
    %v394 = vpop.f32.mrf.mxu0
    %v395 = vadd.f32 %v130, %v394
    %396 = vmatmul.f32.gmra.mxu0 %v149
    %v397 = vpop.f32.mrf.mxu0
    %v398 = vadd.f32 %v131, %v397
    %399 = vmatmul.f32.gmra.mxu0 %v152
    %v400 = vpop.f32.mrf.mxu0
    %v401 = vadd.f32 %v132, %v400
    %402 = vmatmul.f32.gmra.mxu0 %v155
    %v403 = vpop.f32.mrf.mxu0
    %v404 = vadd.f32 %v133, %v403
    %405 = vmatmul.f32.gmra.mxu0 %v158
    %v406 = vpop.f32.mrf.mxu0
    %v407 = vadd.f32 %v134, %v406
    %408 = vdwg.mxu0
    %v409 = vmax.f32 %v386, 0.0
    %v410 = vmax.f32 %v389, 0.0
    %v411 = vmax.f32 %v392, 0.0
    %v412 = vmax.f32 %v395, 0.0
    %v413 = vmax.f32 %v398, 0.0
    %v414 = vmax.f32 %v401, 0.0
    %v415 = vmax.f32 %v404, 0.0
    %v416 = vmax.f32 %v407, 0.0
    %s417 = sld [smem:[#allocation2 + $0x1]]
    %s418 = sadd.f32 %s417, 1.0
    %v419 = vstv %s418
    %v420 = vmul.f32 %v419, %v357
    %v421 = vmul.f32 %v419, %v360
    %v422 = vmul.f32 %v419, %v363
    %v423 = vmul.f32 %v419, %v366
    %424 = vmatpush.msra.mxu0 0.0
    %425 = vmatpush.msra.mxu0 0.0
    %426 = vmatpush.msra.mxu0 0.0
    %427 = vmatpush.msra.mxu0 0.0
    %428 = vmatpush.msra.mxu0 0.0
    %429 = vmatpush.msra.mxu0 0.0
    %430 = vmatpush.msra.mxu0 0.0
    %431 = vmatpush.msra.mxu0 0.0
    %432 = vmatpush.msra.mxu0 %v416
    %433 = vmatpush.msra.mxu0 %v415
    %434 = vmatpush.msra.mxu0 %v414
    %435 = vmatpush.msra.mxu0 %v413
    %436 = vmatpush.msra.mxu0 %v412
    %437 = vmatpush.msra.mxu0 %v411
    %438 = vmatpush.msra.mxu0 %v410
    %439 = vmatpush.msra.mxu0 %v409
    %440 = vmatmul.f32.gmra.mxu0 %v222
    %v441 = vpop.f32.mrf.mxu0
    %v442 = vadd.f32 0.0, %v441
    %443 = vmatmul.f32.gmra.mxu0 %v225
    %v444 = vpop.f32.mrf.mxu0
    %v445 = vadd.f32 0.0, %v444
    %446 = vmatmul.f32.gmra.mxu0 %v228
    %v447 = vpop.f32.mrf.mxu0
    %v448 = vadd.f32 0.0, %v447
    %449 = vmatmul.f32.gmra.mxu0 %v231
    %v450 = vpop.f32.mrf.mxu0
    %v451 = vadd.f32 0.0, %v450
    %452 = vdwg.mxu0
    %v453 = vadd.f32 %v420, %v442
    %v454 = vadd.f32 %v421, %v445
    %v455 = vadd.f32 %v422, %v448
    %v456 = vadd.f32 %v423, %v451
    %s457 = scalar_lea.vmem %s7, 128
    %v458 = vld [vmem:[%s457] sm:$0xff]
    %v459 = vld [vmem:[%s457 + $0x8] sm:$0xff]
    %v460 = vld [vmem:[%s457 + $0x10] sm:$0xff]
    %v461 = vld [vmem:[%s457 + $0x18] sm:$0xff]
    %v462 = vld [vmem:[%s457 + $0x20] sm:$0xff]
    %v463 = vld [vmem:[%s457 + $0x28] sm:$0xff]
    %v464 = vld [vmem:[%s457 + $0x30] sm:$0xff]
    %v465 = vld [vmem:[%s457 + $0x38] sm:$0xff]
    %v466 = vld [vmem:[%s457 + $0x40] sm:$0xff]
    %v467 = vld [vmem:[%s457 + $0x48] sm:$0xff]
    %v468 = vld [vmem:[%s457 + $0x50] sm:$0xff]
    %v469 = vld [vmem:[%s457 + $0x58] sm:$0xff]
    %v470 = vld [vmem:[%s457 + $0x60] sm:$0xff]
    %v471 = vld [vmem:[%s457 + $0x68] sm:$0xff]
    %v472 = vld [vmem:[%s457 + $0x70] sm:$0xff]
    %v473 = vld [vmem:[%s457 + $0x78] sm:$0xff]
    %s474 = scalar_lea.vmem %s8, 1
    %v475 = vld [vmem:[%s474] sm:$0x1]
    %v477 = vperm.slane %v475, 0
    %479 = vmatpush.msra.mxu0 %v473
    %480 = vmatpush.msra.mxu0 %v472
    %481 = vmatpush.msra.mxu0 %v471
    %482 = vmatpush.msra.mxu0 %v470
    %483 = vmatpush.msra.mxu0 %v469
    %484 = vmatpush.msra.mxu0 %v468
    %485 = vmatpush.msra.mxu0 %v467
    %486 = vmatpush.msra.mxu0 %v466
    %487 = vmatpush.msra.mxu0 %v465
    %488 = vmatpush.msra.mxu0 %v464
    %489 = vmatpush.msra.mxu0 %v463
    %490 = vmatpush.msra.mxu0 %v462
    %491 = vmatpush.msra.mxu0 %v461
    %492 = vmatpush.msra.mxu0 %v460
    %493 = vmatpush.msra.mxu0 %v459
    %494 = vmatpush.msra.mxu0 %v458
    %495 = vmatmul.f32.gmra.mxu0 %v453
    %v496 = vpop.f32.mrf.mxu0
    %v497 = vadd.f32 %v477, %v496
    %498 = vmatmul.f32.gmra.mxu0 %v454
    %v499 = vpop.f32.mrf.mxu0
    %v500 = vadd.f32 %v477, %v499
    %501 = vmatmul.f32.gmra.mxu0 %v455
    %v502 = vpop.f32.mrf.mxu0
    %v503 = vadd.f32 %v477, %v502
    %504 = vmatmul.f32.gmra.mxu0 %v456
    %v505 = vpop.f32.mrf.mxu0
    %v506 = vadd.f32 %v477, %v505
    %507 = vdwg.mxu0
    %v508 = vmax.f32 %v497, 0.0
    %v509 = vmax.f32 %v500, 0.0
    %v510 = vmax.f32 %v503, 0.0
    %v511 = vmax.f32 %v506, 0.0
    %s512 = scalar_lea.vmem %s9, 128
    %v513 = vld [vmem:[%s512] sm:$0xff]
    %v514 = vld [vmem:[%s512 + $0x8] sm:$0xff]
    %v515 = vld [vmem:[%s512 + $0x10] sm:$0xff]
    %v516 = vld [vmem:[%s512 + $0x18] sm:$0xff]
    %v517 = vld [vmem:[%s512 + $0x20] sm:$0xff]
    %v518 = vld [vmem:[%s512 + $0x28] sm:$0xff]
    %v519 = vld [vmem:[%s512 + $0x30] sm:$0xff]
    %v520 = vld [vmem:[%s512 + $0x38] sm:$0xff]
    %v521 = vld [vmem:[%s512 + $0x40] sm:$0xff]
    %v522 = vld [vmem:[%s512 + $0x48] sm:$0xff]
    %v523 = vld [vmem:[%s512 + $0x50] sm:$0xff]
    %v524 = vld [vmem:[%s512 + $0x58] sm:$0xff]
    %v525 = vld [vmem:[%s512 + $0x60] sm:$0xff]
    %v526 = vld [vmem:[%s512 + $0x68] sm:$0xff]
    %v527 = vld [vmem:[%s512 + $0x70] sm:$0xff]
    %v528 = vld [vmem:[%s512 + $0x78] sm:$0xff]
    %s529 = scalar_lea.vmem %s10, 1
    %v530 = vld [vmem:[%s529] sm:$0x1]
    %v532 = vperm.slane %v530, 0
    %534 = vmatpush.msra.mxu0 %v528
    %535 = vmatpush.msra.mxu0 %v527
    %536 = vmatpush.msra.mxu0 %v526
    %537 = vmatpush.msra.mxu0 %v525
    %538 = vmatpush.msra.mxu0 %v524
    %539 = vmatpush.msra.mxu0 %v523
    %540 = vmatpush.msra.mxu0 %v522
    %541 = vmatpush.msra.mxu0 %v521
    %542 = vmatpush.msra.mxu0 %v520
    %543 = vmatpush.msra.mxu0 %v519
    %544 = vmatpush.msra.mxu0 %v518
    %545 = vmatpush.msra.mxu0 %v517
    %546 = vmatpush.msra.mxu0 %v516
    %547 = vmatpush.msra.mxu0 %v515
    %548 = vmatpush.msra.mxu0 %v514
    %549 = vmatpush.msra.mxu0 %v513
    %550 = vmatmul.f32.gmra.mxu0 %v508
    %v551 = vpop.f32.mrf.mxu0
    %v552 = vadd.f32 %v532, %v551
    %553 = vmatmul.f32.gmra.mxu0 %v509
    %v554 = vpop.f32.mrf.mxu0
    %v555 = vadd.f32 %v532, %v554
    %556 = vmatmul.f32.gmra.mxu0 %v510
    %v557 = vpop.f32.mrf.mxu0
    %v558 = vadd.f32 %v532, %v557
    %559 = vmatmul.f32.gmra.mxu0 %v511
    %v560 = vpop.f32.mrf.mxu0
    %v561 = vadd.f32 %v532, %v560
    %562 = vdwg.mxu0
    %v563 = vld [vmem:[%s15] sm:$0xff]
    %v565 = vsel %vm135, %v563, 0
    %567 = vmatpush.msra.mxu0 0.0
    %568 = vmatpush.msra.mxu0 0.0
    %569 = vmatpush.msra.mxu0 0.0
    %570 = vmatpush.msra.mxu0 0.0
    %571 = vmatpush.msra.mxu0 0.0
    %572 = vmatpush.msra.mxu0 0.0
    %573 = vmatpush.msra.mxu0 0.0
    %574 = vmatpush.msra.mxu0 0.0
    %575 = vmatpush.msra.mxu0 0.0
    %576 = vmatpush.msra.mxu0 0.0
    %577 = vmatpush.msra.mxu0 0.0
    %578 = vmatpush.msra.mxu0 0.0
    %579 = vmatpush.msra.mxu0 %v561
    %580 = vmatpush.msra.mxu0 %v558
    %581 = vmatpush.msra.mxu0 %v555
    %582 = vmatpush.msra.mxu0 %v552
    %583 = vmatmul.f32.gmra.mxu0 %v565
    %v584 = vpop.f32.mrf.mxu0
    %v585 = vadd.f32 0.0, %v584
    %586 = vdwg.mxu0
    %v587 = vld [vmem:[%s11] sm:$0xff]
    %v588 = vld [vmem:[%s11 + $0x8] sm:$0xff]
    %v589 = vld [vmem:[%s11 + $0x10] sm:$0xff]
    %v590 = vld [vmem:[%s11 + $0x18] sm:$0xff]
    %v591 = vld [vmem:[%s11 + $0x20] sm:$0xff]
    %v592 = vld [vmem:[%s11 + $0x28] sm:$0xff]
    %v593 = vld [vmem:[%s11 + $0x30] sm:$0xff]
    %v594 = vld [vmem:[%s11 + $0x38] sm:$0xff]
    %v595 = vld [vmem:[%s11 + $0x40] sm:$0xff]
    %v596 = vld [vmem:[%s11 + $0x48] sm:$0xff]
    %v597 = vld [vmem:[%s11 + $0x50] sm:$0xff]
    %v598 = vld [vmem:[%s11 + $0x58] sm:$0xff]
    %v599 = vld [vmem:[%s11 + $0x60] sm:$0xff]
    %v600 = vld [vmem:[%s11 + $0x68] sm:$0xff]
    %v601 = vld [vmem:[%s11 + $0x70] sm:$0xff]
    %v602 = vld [vmem:[%s11 + $0x78] sm:$0xff]
    %v603 = vld [vmem:[%s12] sm:$0x1]
    %v605 = vperm.slane %v603, 0
    %607 = vmatpush.msra.mxu0 %v602
    %608 = vmatpush.msra.mxu0 %v601
    %609 = vmatpush.msra.mxu0 %v600
    %610 = vmatpush.msra.mxu0 %v599
    %611 = vmatpush.msra.mxu0 %v598
    %612 = vmatpush.msra.mxu0 %v597
    %613 = vmatpush.msra.mxu0 %v596
    %614 = vmatpush.msra.mxu0 %v595
    %615 = vmatpush.msra.mxu0 %v594
    %616 = vmatpush.msra.mxu0 %v593
    %617 = vmatpush.msra.mxu0 %v592
    %618 = vmatpush.msra.mxu0 %v591
    %619 = vmatpush.msra.mxu0 %v590
    %620 = vmatpush.msra.mxu0 %v589
    %621 = vmatpush.msra.mxu0 %v588
    %622 = vmatpush.msra.mxu0 %v587
    %623 = vmatmul.f32.gmra.mxu0 %v585
    %v624 = vpop.f32.mrf.mxu0
    %v625 = vadd.f32 %v605, %v624
    %626 = vdwg.mxu0
    %v627 = vmax.f32 %v625, 0.0
    %v628 = vld [vmem:[%s13] sm:$0xff]
    %v629 = vld [vmem:[%s13 + $0x8] sm:$0xff]
    %v630 = vld [vmem:[%s13 + $0x10] sm:$0xff]
    %v631 = vld [vmem:[%s13 + $0x18] sm:$0xff]
    %v632 = vld [vmem:[%s13 + $0x20] sm:$0xff]
    %v633 = vld [vmem:[%s13 + $0x28] sm:$0xff]
    %v634 = vld [vmem:[%s13 + $0x30] sm:$0xff]
    %v635 = vld [vmem:[%s13 + $0x38] sm:$0xff]
    %v636 = vld [vmem:[%s13 + $0x40] sm:$0xff]
    %v637 = vld [vmem:[%s13 + $0x48] sm:$0xff]
    %v638 = vld [vmem:[%s13 + $0x50] sm:$0xff]
    %v639 = vld [vmem:[%s13 + $0x58] sm:$0xff]
    %v640 = vld [vmem:[%s13 + $0x60] sm:$0xff]
    %v641 = vld [vmem:[%s13 + $0x68] sm:$0xff]
    %v642 = vld [vmem:[%s13 + $0x70] sm:$0xff]
    %v643 = vld [vmem:[%s13 + $0x78] sm:$0xff]
    %v644 = vld [vmem:[%s14] sm:$0x1]
    %v646 = vperm.slane %v644, 0
    %648 = vmatpush.msra.mxu0 %v643
    %649 = vmatpush.msra.mxu0 %v642
    %650 = vmatpush.msra.mxu0 %v641
    %651 = vmatpush.msra.mxu0 %v640
    %652 = vmatpush.msra.mxu0 %v639
    %653 = vmatpush.msra.mxu0 %v638
    %654 = vmatpush.msra.mxu0 %v637
    %655 = vmatpush.msra.mxu0 %v636
    %656 = vmatpush.msra.mxu0 %v635
    %657 = vmatpush.msra.mxu0 %v634
    %658 = vmatpush.msra.mxu0 %v633
    %659 = vmatpush.msra.mxu0 %v632
    %660 = vmatpush.msra.mxu0 %v631
    %661 = vmatpush.msra.mxu0 %v630
    %662 = vmatpush.msra.mxu0 %v629
    %663 = vmatpush.msra.mxu0 %v628
    %664 = vmatmul.f32.gmra.mxu0 %v627
    %v665 = vpop.f32.mrf.mxu0
    %v666 = vadd.f32 %v646, %v665
    %667 = vdwg.mxu0
    %668 = vst [vmem:[%s16] sm:$0xff] %v666
    // Predicated region
    $region70: #{gine_base_forward.1} parent=1 // pred_check
      _
    $region71: #{gine_base_forward.1} parent=1 // pred_check_branch
      %670 = sbr.rel (0) target = $region73
    $region72: #{gine_base_forward.1} parent=1 // pred_region
      _
    $region73: #{gine_base_forward.1} parent=1 // pred_fallthru
      _
    // Predicated region
    $region74: #{gine_base_forward.1} parent=1 // pred_check
      _
    $region75: #{gine_base_forward.1} parent=1 // pred_check_branch
      %672 = sbr.rel (0) target = $region77
    $region76: #{gine_base_forward.1} parent=1 // pred_region
      _
    $region77: #{gine_base_forward.1} parent=1 // pred_fallthru
      _
    %673 = vsyncpa [#allocation3], 1

</llo_original>
